<compile_context>
chip_gen: v5e
topology: v5e:2x2
jax: 0.10.0
libtpu: 0.0.40
codegen_flags: <defaults>
</compile_context>

<pallas_src>
import functools

import jax
import jax.numpy as jnp
from jax.experimental import pallas as pl
from jax.experimental.pallas import tpu as pltpu

MIN_DENOMINATOR = 1e-12


def _round_up(x, m):
    return ((x + m - 1) // m) * m


# ----------------------------------------------------------------------------
# Pallas kernel: scatter-mean over voxel cells.
# Grid = (B, C_tiles, N_tiles); one (Fv_pad, C_tile) output block per (b, c),
# accumulated over the innermost N axis in a f32 VMEM scratch.
# ----------------------------------------------------------------------------
def _voxel_scatter_kernel(idx_ref, vals_ref, out_ref, acc_ref, *, fv, c_tile):
    n_i = pl.program_id(2)

    @pl.when(n_i == 0)
    def _init():
        acc_ref[...] = jnp.zeros_like(acc_ref)

    idx = idx_ref[0]                       # (n_tile, 1) int32 flat cell index
    vals = vals_ref[0]                     # (fv_pad, n_tile) bf16
    n_tile = vals.shape[1]

    # one-hot for this C tile only; shift idx so the iota is tile-invariant.
    c_off = pl.program_id(1) * c_tile
    idx_local = idx - c_off                                            # (n_tile, 1)
    cell_ids = jax.lax.broadcasted_iota(jnp.int32, (n_tile, c_tile), 1)
    onehot = (cell_ids == idx_local).astype(vals.dtype)                # (n_tile, c_tile) bf16

    # (Fv_pad, n_tile) @ (n_tile, c_tile) -> (Fv_pad, c_tile): C is lane-dense,
    # bf16 MXU operands, f32 accumulation.
    acc_ref[...] += jax.lax.dot_general(
        vals, onehot,
        dimension_numbers=(((1,), (0,)), ((), ())),
        preferred_element_type=jnp.float32)

    @pl.when(n_i == pl.num_programs(2) - 1)
    def _finalize():
        acc = acc_ref[...]                                             # (Fv_pad, c_tile)
        count = acc[fv - 1:fv, :]                                      # ones row = per-cell count
        inv = pl.reciprocal(jnp.maximum(count, 1.0), approx=False)     # (1, c_tile)
        out_ref[0] = acc * inv                                         # scatter-mean


def scatter_mean_pallas(vals_t, idx, fv, c_pad, *, c_tile=512, n_tile=256):
    """vals_t: (B, Fv_pad, N_pad) bf16, idx: (B, N_pad, 1) int32 -> (B, Fv_pad, C_pad) f32."""
    bs, fv_pad, n_pad = vals_t.shape
    assert c_pad % c_tile == 0 and n_pad % n_tile == 0 and fv_pad % 8 == 0
    grid = (bs, c_pad // c_tile, n_pad // n_tile)
    return pl.pallas_call(
        functools.partial(_voxel_scatter_kernel, fv=fv, c_tile=c_tile),
        out_shape=jax.ShapeDtypeStruct((bs, fv_pad, c_pad), jnp.float32),
        grid_spec=pltpu.PrefetchScalarGridSpec(
            num_scalar_prefetch=0,
            grid=grid,
            in_specs=[
                pl.BlockSpec((1, n_tile, 1), lambda b, c, n: (b, n, 0)),
                pl.BlockSpec((1, fv_pad, n_tile), lambda b, c, n: (b, 0, n)),
            ],
            out_specs=pl.BlockSpec((1, fv_pad, c_tile), lambda b, c, n: (b, 0, c)),
            scratch_shapes=[pltpu.VMEM((fv_pad, c_tile), jnp.float32)],
        ),
        compiler_params=pltpu.CompilerParams(
            dimension_semantics=("parallel", "parallel", "arbitrary")),
    )(idx, vals_t)


def scatter_mean_ref(vals_t, idx, fv, c_pad, **_unused):
    """Pure-JAX reference of the tiled scatter-mean (same inputs as the kernel)."""
    v = vals_t.astype(jnp.float32)                  # (B, Fv_pad, N_pad)
    ib = idx[..., 0]                                # (B, N_pad)

    def one(vb, i):                                 # vb (Fv_pad, N_pad), i (N_pad,)
        valid = i >= 0
        safe = jnp.where(valid, i, 0)
        contrib = jnp.where(valid[:, None], vb.T, 0.0)              # (N_pad, Fv_pad)
        acc = jnp.zeros((c_pad, vb.shape[0]), jnp.float32).at[safe].add(contrib)
        acc = acc.T                                                  # (Fv_pad, C_pad)
        count = acc[fv - 1:fv, :]
        return acc / jnp.maximum(count, 1.0)

    return jax.vmap(one)(v, ib)


# ----------------------------------------------------------------------------
# VoxelGrid.coords_to_bounding_voxel_grid equivalent
# ----------------------------------------------------------------------------
def coords_to_bounding_voxel_grid(coords, coord_features, bounds, voxel_size,
                                  scatter_fn=scatter_mean_pallas,
                                  max_c_tile=512, max_n_tile=256):
    """coords: (B, N, 3), coord_features: (B, N, F), bounds: (Bb, 6)."""
    bs, N, _ = coords.shape
    F = coord_features.shape[-1]
    V = voxel_size
    D = V + 2
    fv = 4 + F
    C = D * D * D

    # Adaptive, hardware-aligned tile sizes: N tile multiple of 128 (lane-dense
    # bf16 value tile), C tile multiple of 256 (MXU column width), capped so the
    # per-step one-hot stays small enough for v7x's 64 MiB VMEM.
    n_tile = min(max_n_tile, _round_up(N, 128))
    c_tile = min(max_c_tile, _round_up(C, 256))

    bb_mins = bounds[..., 0:3]
    bb_maxs = bounds[..., 3:6]
    bb_ranges = bb_maxs - bb_mins
    res = bb_ranges / (float(V) + MIN_DENOMINATOR)           # dims_orig = V
    denom = res + MIN_DENOMINATOR                             # voxel_indicy_denominator
    mins_shifted = bb_mins - res                              # bb_mins_shifted

    mins_shifted = jnp.broadcast_to(mins_shifted.reshape(-1, 1, 3), (bs, 1, 3))
    denom = jnp.broadcast_to(denom.reshape(-1, 1, 3), (bs, 1, 3))

    # voxel-index math hoisted out of the kernel (plain XLA).
    coords_f = coords.astype(jnp.float32)
    fl = jnp.floor((coords_f - mins_shifted) / denom).astype(jnp.int32)
    vi = jnp.clip(fl, 0, D - 1)
    idx = vi[..., 0] * (D * D) + vi[..., 1] * D + vi[..., 2]  # (B, N) flat cell id

    ones = jnp.ones((bs, N, 1), jnp.float32)
    vals = jnp.concatenate(
        [coords_f, coord_features.astype(jnp.float32), ones], axis=-1)   # (B, N, 4+F)
    vals_t = jnp.transpose(vals, (0, 2, 1)).astype(jnp.bfloat16)         # (B, Fv, N)

    # pad: Fv -> multiple of 16 (bf16 sublanes), N -> multiple of n_tile,
    # C -> multiple of c_tile.  Padded points get idx=-1 and zero values.
    fv_pad = _round_up(fv, 16)
    n_pad = _round_up(N, n_tile)
    c_pad = _round_up(C, c_tile)
    vals_t = jnp.pad(vals_t, ((0, 0), (0, fv_pad - fv), (0, n_pad - N)))
    idx = jnp.pad(idx, ((0, 0), (0, n_pad - N)), constant_values=-1)
    idx = idx[..., None].astype(jnp.int32)                               # (B, N_pad, 1)

    mean_grid = scatter_fn(vals_t, idx, fv, c_pad,
                           c_tile=c_tile, n_tile=n_tile)                 # (B, Fv_pad, C_pad)

    mean_grid = mean_grid[:, :fv, :C].reshape(bs, fv, D, D, D)
    vox = jnp.transpose(mean_grid, (0, 2, 3, 4, 1))[:, 1:-1, 1:-1, 1:-1, :]  # (B,V,V,V,4+F)
    occupied = (vox[..., -1:] > 0).astype(jnp.float32)

    # index grid (0..V-1 on each axis) / voxel_d
    ar = jnp.arange(V, dtype=jnp.float32)
    ig = jnp.stack(jnp.meshgrid(ar, ar, ar, indexing="ij"), axis=-1) / float(V)
    ig = jnp.broadcast_to(ig[None], (bs, V, V, V, 3))

    vox_out = jnp.concatenate([vox[..., :-1], ig, occupied], axis=-1)    # (B,V,V,V,3+F+3+1)
    return jnp.transpose(vox_out, (0, 4, 1, 2, 3))                       # NCDHW


# ----------------------------------------------------------------------------
# QFunction.forward equivalent
# ----------------------------------------------------------------------------
def qfunction_forward(obs, proprio, pcd, lang_goal_embs, bounds, voxel_size,
                      scatter_fn=scatter_mean_pallas):
    bs = obs[0][0].shape[0]
    pcd_flat = jnp.concatenate(
        [jnp.transpose(p, (0, 2, 3, 1)).reshape(bs, -1, 3) for p in pcd], axis=1)
    image_features = [o[0] for o in obs]
    feat_size = image_features[0].shape[1]
    flat_imag_features = jnp.concatenate(
        [jnp.transpose(p, (0, 2, 3, 1)).reshape(bs, -1, feat_size)
         for p in image_features], axis=1)

    voxel_grid = coords_to_bounding_voxel_grid(
        pcd_flat.astype(jnp.float32), flat_imag_features, bounds, voxel_size,
        scatter_fn=scatter_fn)

    # TODO(synk): `self._qnet` is an externally supplied perceiver_encoder whose
    # architecture is not part of the reference code, so q_trans / rot_and_grip_q /
    # collision_q cannot be computed here.
    q_trans = rot_and_grip_q = collision_q = None
    return q_trans, rot_and_grip_q, collision_q, voxel_grid


# ----------------------------------------------------------------------------
if __name__ == "__main__":
    key = jax.random.PRNGKey(0)
    bs, F, H, W, V = 2, 3, 8, 8, 8          # 2 cameras, 128 points/batch, 8^3 voxels
    k1, k2, k3, k4, k5, k6 = jax.random.split(key, 6)

    pcd0 = jax.random.uniform(k1, (bs, 3, H, W), jnp.float32)       # points in [0, 1)
    pcd1 = jax.random.uniform(k5, (bs, 3, H, W), jnp.float32)
    feat0 = jax.random.normal(k2, (bs, F, H, W), jnp.float32)
    feat1 = jax.random.normal(k6, (bs, F, H, W), jnp.float32)
    obs = [[feat0], [feat1]]
    pcd = [pcd0, pcd1]
    proprio = jax.random.normal(k3, (bs, 4), jnp.float32)           # unused (qnet TODO)
    lang_goal_embs = jax.random.normal(k4, (1, 77, 32), jnp.float32)  # unused (qnet TODO)
    bounds = jnp.array([[0.0, 0.0, 0.0, 1.0, 1.0, 1.0]], jnp.float32)

    _, _, _, voxel_grid = qfunction_forward(
        obs, proprio, pcd, lang_goal_embs, bounds, V,
        scatter_fn=scatter_mean_pallas)
    voxel_grid = jax.block_until_ready(voxel_grid)
    assert voxel_grid.shape == (bs, 3 + F + 3 + 1, V, V, V), voxel_grid.shape

    # correctness check against a pure-JAX scatter reference (same bf16 inputs)
    _, _, _, voxel_grid_ref = qfunction_forward(
        obs, proprio, pcd, lang_goal_embs, bounds, V,
        scatter_fn=scatter_mean_ref)
    voxel_grid_ref = jax.block_until_ready(voxel_grid_ref)
    assert jnp.allclose(voxel_grid, voxel_grid_ref, atol=1e-3, rtol=1e-3), (
        float(jnp.max(jnp.abs(voxel_grid - voxel_grid_ref))))

    print("KERNEL_OK")
</pallas_src>

<mosaic_0001>
module attributes {stable_mosaic.version = 11 : i64} {
  func.func @_voxel_scatter_kernel(%arg0: i32, %arg1: i32, %arg2: i32, %arg3: memref<1x128x1xi32, #tpu.memory_space<vmem>>, %arg4: memref<1x16x128xbf16, #tpu.memory_space<vmem>>, %arg5: memref<1x16x512xf32, #tpu.memory_space<vmem>>, %arg6: memref<16x512xf32, #tpu.memory_space<vmem>>) attributes {dimension_semantics = [#tpu.dimension_semantics<parallel>, #tpu.dimension_semantics<parallel>, #tpu.dimension_semantics<arbitrary>], iteration_bounds = array<i64: 2, 2, 1>, scalar_prefetch = 0 : i64, scratch_operands = 1 : i64, tpu.core_type = #tpu.core_type<tc>, window_params = [{transform_indices = @transform_0, window_bounds = array<i64: 1, 128, 1>}, {transform_indices = @transform_1, window_bounds = array<i64: 1, 16, 128>}, {transform_indices = @transform_2, window_bounds = array<i64: 1, 16, 512>}]} {
    %c0_i32 = arith.constant 0 : i32
    %0 = arith.cmpi eq, %arg2, %c0_i32 : i32
    %1 = arith.extui %0 : i1 to i32
    %c0_i32_0 = arith.constant 0 : i32
    %2 = arith.cmpi ne, %1, %c0_i32_0 : i32
    scf.if %2 {
      %cst_12 = arith.constant 0.000000e+00 : f32
      %23 = vector.broadcast %cst_12 : f32 to vector<16x512xf32>
      %c0_13 = arith.constant 0 : index
      %c0_14 = arith.constant 0 : index
      %24 = vector.load %arg6[%c0_13, %c0_14] : memref<16x512xf32, #tpu.memory_space<vmem>>, vector<16x512xf32>
      tpu.vector_store %arg6[%c0_13, %c0_14], %23 {strides = array<i32>} : memref<16x512xf32, #tpu.memory_space<vmem>>, vector<16x512xf32>,
    } else {
    }
    %c0 = arith.constant 0 : index
    %c0_1 = arith.constant 0 : index
    %c0_2 = arith.constant 0 : index
    %3 = vector.load %arg3[%c0, %c0_1, %c0_2] : memref<1x128x1xi32, #tpu.memory_space<vmem>>, vector<1x128x1xi32>
    %4 = vector.shape_cast %3 : vector<1x128x1xi32> to vector<128x1xi32>
    %c0_3 = arith.constant 0 : index
    %c0_4 = arith.constant 0 : index
    %c0_5 = arith.constant 0 : index
    %5 = vector.load %arg4[%c0_3, %c0_4, %c0_5] : memref<1x16x128xbf16, #tpu.memory_space<vmem>>, vector<1x16x128xbf16>
    %6 = vector.shape_cast %5 : vector<1x16x128xbf16> to vector<16x128xbf16>
    %c512_i32 = arith.constant 512 : i32
    %7 = arith.muli %arg1, %c512_i32 : i32
    %8 = vector.broadcast %7 : i32 to vector<128x1xi32>
    %9 = arith.subi %4, %8 : vector<128x1xi32>
    %10 = tpu.iota {dimensions = array<i32: 1>} : vector<128x512xi32>
    %11 = vector.broadcast %9 : vector<128x1xi32> to vector<128x512xi32>
    %12 = arith.cmpi eq, %10, %11 : vector<128x512xi32>
    %13 = arith.extui %12 : vector<128x512xi1> to vector<128x512xi32>
    %14 = arith.sitofp %13 : vector<128x512xi32> to vector<128x512xf32>
    %15 = arith.truncf %14 : vector<128x512xf32> to vector<128x512xbf16>
    %c0_6 = arith.constant 0 : index
    %c0_7 = arith.constant 0 : index
    %16 = vector.load %arg6[%c0_6, %c0_7] : memref<16x512xf32, #tpu.memory_space<vmem>>, vector<16x512xf32>
    %cst = arith.constant dense<0.000000e+00> : vector<16x512xf32>
    %17 = tpu.matmul %6, %15, %cst {dimension_numbers = #tpu.dot_dimension_numbers<[1], [0], [0], [1], [0, 0, 1, 1], [], []>} : vector<16x128xbf16>, vector<128x512xbf16>, vector<16x512xf32> -> vector<16x512xf32>
    %18 = arith.addf %16, %17 : vector<16x512xf32>
    %c0_8 = arith.constant 0 : index
    %c0_9 = arith.constant 0 : index
    %19 = vector.load %arg6[%c0_8, %c0_9] : memref<16x512xf32, #tpu.memory_space<vmem>>, vector<16x512xf32>
    tpu.vector_store %arg6[%c0_8, %c0_9], %18 {strides = array<i32>} : memref<16x512xf32, #tpu.memory_space<vmem>>, vector<16x512xf32>,
    %c0_i32_10 = arith.constant 0 : i32
    %20 = arith.cmpi eq, %arg2, %c0_i32_10 : i32
    %21 = arith.extui %20 : i1 to i32
    %c0_i32_11 = arith.constant 0 : i32
    %22 = arith.cmpi ne, %21, %c0_i32_11 : i32
    scf.if %22 {
      %c0_12 = arith.constant 0 : index
      %c0_13 = arith.constant 0 : index
      %23 = vector.load %arg6[%c0_12, %c0_13] : memref<16x512xf32, #tpu.memory_space<vmem>>, vector<16x512xf32>
      %24 = vector.extract_strided_slice %23 {offsets = [6, 0], sizes = [1, 512], strides = [1, 1]} : vector<16x512xf32> to vector<1x512xf32>
      %cst_14 = arith.constant 1.000000e+00 : f32
      %25 = vector.broadcast %cst_14 : f32 to vector<1x512xf32>
      %26 = arith.maximumf %24, %25 : vector<1x512xf32>
      %27 = tpu.reciprocal %26 : vector<1x512xf32> -> vector<1x512xf32>
      %28 = vector.broadcast %27 : vector<1x512xf32> to vector<16x512xf32>
      %29 = arith.mulf %23, %28 : vector<16x512xf32>
      %c0_15 = arith.constant 0 : index
      %c0_16 = arith.constant 0 : index
      %c0_17 = arith.constant 0 : index
      %30 = vector.load %arg5[%c0_15, %c0_16, %c0_17] : memref<1x16x512xf32, #tpu.memory_space<vmem>>, vector<1x16x512xf32>
      %31 = vector.shape_cast %30 : vector<1x16x512xf32> to vector<16x512xf32>
      %32 = vector.shape_cast %29 : vector<16x512xf32> to vector<1x16x512xf32>
      tpu.vector_store %arg5[%c0_15, %c0_16, %c0_17], %32 {strides = array<i32>} : memref<1x16x512xf32, #tpu.memory_space<vmem>>, vector<1x16x512xf32>,
    } else {
    }
    return
  }
  func.func @transform_0(%arg0: i32, %arg1: i32, %arg2: i32) -> (i32, i32, i32) {
    %c0_i32 = arith.constant 0 : i32
    %c0_i32_0 = arith.constant 0 : i32
    return %arg0, %arg2, %c0_i32 : i32, i32, i32
  }
  func.func @transform_1(%arg0: i32, %arg1: i32, %arg2: i32) -> (i32, i32, i32) {
    %c0_i32 = arith.constant 0 : i32
    %c0_i32_0 = arith.constant 0 : i32
    return %arg0, %c0_i32, %arg2 : i32, i32, i32
  }
  func.func @transform_2(%arg0: i32, %arg1: i32, %arg2: i32) -> (i32, i32, i32) {
    %c0_i32 = arith.constant 0 : i32
    %c0_i32_0 = arith.constant 0 : i32
    return %arg0, %c0_i32, %arg1 : i32, i32, i32
  }
}

</mosaic_0001>

<llo_original>
// kernel: tpu_custom_call.1
$region0: #{tpu_custom_call.1}
  #allocation0 [shape = 'u32[]', space=smem, size = 0x4, offset = 0x4, fixed_abs, tag = 'smem constant byte address 0x4 - core index']
  #allocation1 [shape = 'u32[72,128]{1,0:T(1,128)}', space=vmem, size = 0x9000, scoped, tag = 'internal scratch']
  #allocation2 [shape = 'f32[16,512]{1,0:T(8,128)}', space=vmem, size = 0x8000, scoped, tag = 'scratch operand']
  %s0 = inlined_call_operand.vmem [shape: s32[2,128,1], index: 0, kind: input, shape index: {}]
  %s1 = inlined_call_operand.vmem [shape: bf16[2,16,128], index: 1, kind: input, shape index: {}]
  %s2 = inlined_call_operand.hbm [shape: f32[2,16,1024], index: 2, kind: output, shape index: {}]
  %s3 = sld [smem:[#allocation0]]
  $region49: #{tpu_custom_call.1} parent=0
    _
  %s5 = ssub.s32 1, %s3
  %s6 = scalar_select 0, %s5, %s3
  $region1: #{tpu_custom_call.1} parent=0
    #allocation3 [shape = 'u8[65536]{0}', space=vmem, size = 0x10000, scoped, tag = 'output window, operand 0']
    #allocation4 [shape = 's32[2]{0}', space=sflag, size = 0x8, scoped, tag = 'scoped memory for tpu_custom_call.1']
    %7 = vsyncpa [#allocation4], 0
    %s8 = scalar_lea.sflag [#allocation4], 1
    %9 = vsyncpa %s8, 0
    loop: start=0, step=1, limit=6
    $region2: #{tpu_custom_call.1} parent=1 // loop_pre_header
      _
    $region3: #{tpu_custom_call.1} parent=1 // loop_header
      %s11 = sphi 0, %s15
      %p12 = scmp.ge.s32.totalorder %s11, 6
      %s18 = sphi 0, %s37
      %s19 = sphi 0, %s33
      %s20 = sphi 0, %s29
      %s21 = sphi 0, %s18
      %s22 = sphi 0, %s19
      %s23 = sphi 0, %s20
      %s24 = sphi 0, %s21
      %s25 = sphi 0, %s22
      %s26 = sphi 0, %s23
      %s42 = sphi 0, %s44
      %s45 = sphi 0, %s42
      %s46 = sphi 0, %s45
      %s62 = sphi 0, %s46
      %s70 = sphi 0, %s72
      %s73 = sphi 0, %s70
      %s74 = sphi 0, %s73
      %s90 = sphi 0, %s74
      %s98 = sphi 0, %s100
      %s101 = sphi 0, %s98
      %s102 = sphi 0, %s101
      %s118 = sphi 0, %s102
    $region4: #{tpu_custom_call.1} parent=1 // loop_header_branch
      %14 = sbr.rel (%p12) target = $region8
    $region5: #{tpu_custom_call.1} parent=1 // loop_body
      %s16 = ssub.s32 %s11, 1
      %s17 = ssub.s32 %s11, 2
      %s27 = sadd.s32 1, %s20
      %p28 = scmp.ge.s32.totalorder %s27, 1
      %s29 = scalar_select %p28, 0, %s27
      %s30 = sadd.s32 1, %s19
      %s31 = scalar_select %p28, %s30, %s19
      %p32 = scmp.ge.s32.totalorder %s31, 2
      %s33 = scalar_select %p32, 0, %s31
      %s34 = sadd.s32 1, %s18
      %s35 = scalar_select %p32, %s34, %s18
      %p36 = scmp.ge.s32.totalorder %s35, 2
      %s37 = scalar_select %p36, 0, %s35
      %s38 = ssub.s32 %s18, %s37
      %s39 = ssub.s32 %s20, %s29
      %s40 = sor.u32 %s38, %s39
      %p41 = scmp.eq.s32.totalorder %s40, 0
      %s43 = sadd.s32 %s42, 1
      %s44 = scalar_select %p41, %s42, %s43
      %p47 = pneg %p41
      %p48 = scmp.eq.s32.totalorder %s11, 3
      %p49 = por %p47, %p48
      %p50 = scmp.ne.s32.totalorder %s42, %s45
      %p51 = scmp.eq.s32.totalorder %s11, 0
      %p52 = por %p50, %p51
      %p53 = scmp.ne.s32.totalorder %s42, %s45
      %p54 = scmp.eq.s32.totalorder %s16, 3
      %p55 = por %p53, %p54
      %p56 = scmp.ne.s32.totalorder %s45, %s46
      %p57 = scmp.eq.s32.totalorder %s16, 0
      %p58 = por %p56, %p57
      %p59 = scmp.ne.s32.totalorder %s45, %s46
      %p60 = scmp.eq.s32.totalorder %s17, 3
      %p61 = por %p59, %p60
      %p63 = scmp.ne.s32.totalorder %s46, %s62
      %p64 = scmp.eq.s32.totalorder %s17, 0
      %p65 = por %p63, %p64
      %s66 = ssub.s32 %s18, %s37
      %s67 = ssub.s32 %s20, %s29
      %s68 = sor.u32 %s66, %s67
      %p69 = scmp.eq.s32.totalorder %s68, 0
      %s71 = sadd.s32 %s70, 1
      %s72 = scalar_select %p69, %s70, %s71
      %p75 = pneg %p69
      %p76 = scmp.eq.s32.totalorder %s11, 3
      %p77 = por %p75, %p76
      %p78 = scmp.ne.s32.totalorder %s70, %s73
      %p79 = scmp.eq.s32.totalorder %s11, 0
      %p80 = por %p78, %p79
      %p81 = scmp.ne.s32.totalorder %s70, %s73
      %p82 = scmp.eq.s32.totalorder %s16, 3
      %p83 = por %p81, %p82
      %p84 = scmp.ne.s32.totalorder %s73, %s74
      %p85 = scmp.eq.s32.totalorder %s16, 0
      %p86 = por %p84, %p85
      %p87 = scmp.ne.s32.totalorder %s73, %s74
      %p88 = scmp.eq.s32.totalorder %s17, 3
      %p89 = por %p87, %p88
      %p91 = scmp.ne.s32.totalorder %s74, %s90
      %p92 = scmp.eq.s32.totalorder %s17, 0
      %p93 = por %p91, %p92
      %s94 = ssub.s32 %s18, %s37
      %s95 = ssub.s32 %s19, %s33
      %s96 = sor.u32 %s94, %s95
      %p97 = scmp.eq.s32.totalorder %s96, 0
      %s99 = sadd.s32 %s98, 1
      %s100 = scalar_select %p97, %s98, %s99
      %p103 = pneg %p97
      %p104 = scmp.eq.s32.totalorder %s11, 3
      %p105 = por %p103, %p104
      %p106 = scmp.ne.s32.totalorder %s98, %s101
      %p107 = scmp.eq.s32.totalorder %s11, 0
      %p108 = por %p106, %p107
      %p109 = scmp.ne.s32.totalorder %s98, %s101
      %p110 = scmp.eq.s32.totalorder %s16, 3
      %p111 = por %p109, %p110
      %p112 = scmp.ne.s32.totalorder %s101, %s102
      %p113 = scmp.eq.s32.totalorder %s16, 0
      %p114 = por %p112, %p113
      %p115 = scmp.ne.s32.totalorder %s101, %s102
      %p116 = scmp.eq.s32.totalorder %s17, 3
      %p117 = por %p115, %p116
      %p119 = scmp.ne.s32.totalorder %s102, %s118
      %p120 = scmp.eq.s32.totalorder %s17, 0
      %p121 = por %p119, %p120
      %p122 = scmp.le.s32.totalorder 1, %s11
      %p123 = scmp.lt.s32.totalorder %s11, 5
      %p124 = pnand %p122, %p123
      %p125 = pneg %p124
      // Predicated region
      $region9: #{tpu_custom_call.1} parent=5 // pred_check
        _
      $region10: #{tpu_custom_call.1} parent=5 // pred_check_branch
        %127 = sbr.rel (%p124) target = $region12
      $region11: #{tpu_custom_call.1} parent=5 // pred_region
        %s128 = ssub.s32 %s11, 1
      $region12: #{tpu_custom_call.1} parent=5 // pred_fallthru
        _
      %p129 = scmp.lt.s32.totalorder %s11, 4
      // Predicated region
      $region13: #{tpu_custom_call.1} parent=5 // pred_check
        %p130 = pneg %p129
      $region14: #{tpu_custom_call.1} parent=5 // pred_check_branch
        %132 = sbr.rel (%p130) target = $region16
      $region15: #{tpu_custom_call.1} parent=5 // pred_region
        // Predicated region
        $region17: #{tpu_custom_call.1} parent=15 // pred_check
          %p133 = pneg %p52
        $region18: #{tpu_custom_call.1} parent=15 // pred_check_branch
          %135 = sbr.rel (%p133) target = $region20
        $region19: #{tpu_custom_call.1} parent=15 // pred_region
          %s136 = smul.u32 16, %s20
          %p137 = scmp.lt.s32.totalorder %s18, 1
          %s138 = scalar_select %p137, %s18, 1
          %p139 = scmp.lt.s32.totalorder %s136, 15
          %s140 = scalar_select %p139, %s136, 15
          %s141 = smul.addr %s138, 16
          %s142 = sadd.s32 %s140, %s141
          %s143 = smul.addr %s142, 8
          %s144 = scalar_lea.vmem %s0, %s143
          %s145 = smul.u32 16, %s20
        $region20: #{tpu_custom_call.1} parent=15 // pred_fallthru
          _
        // Predicated region
        $region21: #{tpu_custom_call.1} parent=15 // pred_check
          %p146 = pneg %p80
        $region22: #{tpu_custom_call.1} parent=15 // pred_check_branch
          %148 = sbr.rel (%p146) target = $region24
        $region23: #{tpu_custom_call.1} parent=15 // pred_region
          %p149 = scmp.lt.s32.totalorder %s18, 1
          %s150 = scalar_select %p149, %s18, 1
          %p151 = scmp.lt.s32.totalorder %s20, 0
          %s152 = scalar_select %p151, %s20, 0
          %s153 = smul.addr %s150, 2
          %s154 = sadd.s32 %s152, %s153
          %s155 = smul.addr %s154, 4
          %s156 = scalar_lea.vmem %s1, %s155
        $region24: #{tpu_custom_call.1} parent=15 // pred_fallthru
          _
      $region16: #{tpu_custom_call.1} parent=5 // pred_fallthru
        _
      %p157 = scmp.le.s32.totalorder 1, %s11
      %p158 = scmp.lt.s32.totalorder %s11, 5
      %p159 = pnand %p157, %p158
      %p160 = pneg %p159
      // Predicated region
      $region25: #{tpu_custom_call.1} parent=5 // pred_check
        _
      $region26: #{tpu_custom_call.1} parent=5 // pred_check_branch
        %162 = sbr.rel (%p159) target = $region28
      $region27: #{tpu_custom_call.1} parent=5 // pred_region
        %s163 = ssub.s32 %s11, 1
        %s164 = smul.u32 16, %s23
        %p165 = scmp.lt.s32.totalorder %s21, 1
        %s166 = scalar_select %p165, %s21, 1
        %p167 = scmp.lt.s32.totalorder %s164, 15
        %s168 = scalar_select %p167, %s164, 15
        %s169 = smul.addr %s166, 16
        %s170 = sadd.s32 %s168, %s169
        %s171 = smul.addr %s170, 8
        %s172 = scalar_lea.vmem %s0, %s171
        %p173 = pneg %p58
        %p174 = pneg %p55
        %p175 = scmp.lt.s32.totalorder %s21, 1
        %s176 = scalar_select %p175, %s21, 1
        %p177 = scmp.lt.s32.totalorder %s23, 0
        %s178 = scalar_select %p177, %s23, 0
        %s179 = smul.addr %s176, 2
        %s180 = sadd.s32 %s178, %s179
        %s181 = smul.addr %s180, 4
        %s182 = scalar_lea.vmem %s1, %s181
        %p183 = pneg %p86
        %p184 = pneg %p83
        %p185 = pneg %p114
        %p186 = pneg %p111
        %s187 = sand.u32 %s101, 1
        %s188 = scalar_lea.sflag [#allocation4], %s187
        %s189 = sand.u32 %s101, 1
        %s190 = smul.addr %s189, 64
        %s191 = scalar_lea.vmem [#allocation3], %s190
        %s192 = smul.u32 16, %s23
        %p193 = scmp.lt.s32.totalorder %s21, 1
        %s194 = scalar_select %p193, %s21, 1
        %p195 = scmp.lt.s32.totalorder %s192, 15
        %s196 = scalar_select %p195, %s192, 15
        %s197 = smul.addr %s194, 16
        %s198 = sadd.s32 %s196, %s197
        %s199 = smul.addr %s198, 8
        %s200 = scalar_lea.vmem %s0, %s199
        %s201 = smul.u32 16, %s23
        %p202 = scmp.lt.s32.totalorder %s21, 1
        %s203 = scalar_select %p202, %s21, 1
        %p204 = scmp.lt.s32.totalorder %s23, 0
        %s205 = scalar_select %p204, %s23, 0
        %s206 = smul.addr %s203, 2
        %s207 = sadd.s32 %s205, %s206
        %s208 = smul.addr %s207, 4
        %s209 = scalar_lea.vmem %s1, %s208
        %s210 = smul.u32 4, %s22
        %p211 = scmp.eq.s32.totalorder %s23, 0
        // Predicated region
        $region29: #{tpu_custom_call.1} parent=27 // pred_check
          %p212 = pneg %p211
        $region30: #{tpu_custom_call.1} parent=27 // pred_check_branch
          %214 = sbr.rel (%p212) target = $region32
        $region31: #{tpu_custom_call.1} parent=27 // pred_region
          %215 = vst [vmem:[#allocation2] sm:$0xff] 0.0
          %216 = vst [vmem:[#allocation2 + $0x8] sm:$0xff] 0.0
          %217 = vst [vmem:[#allocation2 + $0x10] sm:$0xff] 0.0
          %218 = vst [vmem:[#allocation2 + $0x18] sm:$0xff] 0.0
          %219 = vst [vmem:[#allocation2 + $0x20] sm:$0xff] 0.0
          %220 = vst [vmem:[#allocation2 + $0x28] sm:$0xff] 0.0
          %221 = vst [vmem:[#allocation2 + $0x30] sm:$0xff] 0.0
          %222 = vst [vmem:[#allocation2 + $0x38] sm:$0xff] 0.0
        $region32: #{tpu_custom_call.1} parent=27 // pred_fallthru
          _
        %v223 = vld [vmem:[%s200] sm:$0xff]
        %v224 = vld [vmem:[%s200 + $0x8] sm:$0xff]
        %v225 = vld [vmem:[%s200 + $0x10] sm:$0xff]
        %v226 = vld [vmem:[%s200 + $0x18] sm:$0xff]
        %v227 = vld [vmem:[%s200 + $0x20] sm:$0xff]
        %v228 = vld [vmem:[%s200 + $0x28] sm:$0xff]
        %v229 = vld [vmem:[%s200 + $0x30] sm:$0xff]
        %v230 = vld [vmem:[%s200 + $0x38] sm:$0xff]
        %v231 = vld [vmem:[%s200 + $0x40] sm:$0xff]
        %v232 = vld [vmem:[%s200 + $0x48] sm:$0xff]
        %v233 = vld [vmem:[%s200 + $0x50] sm:$0xff]
        %v234 = vld [vmem:[%s200 + $0x58] sm:$0xff]
        %v235 = vld [vmem:[%s200 + $0x60] sm:$0xff]
        %v236 = vld [vmem:[%s200 + $0x68] sm:$0xff]
        %v237 = vld [vmem:[%s200 + $0x70] sm:$0xff]
        %v238 = vld [vmem:[%s200 + $0x78] sm:$0xff]
        %v239 = vld [vmem:[%s209] sm:$0xf]
        %v240 = vld [vmem:[%s209 + $0x4] sm:$0xf]
        %s241 = smul.u32 %s22, 512
        %v242 = vstv %s241
        %v243 = vsub.s32 %v223, %v242
        %v244 = vsub.s32 %v224, %v242
        %v245 = vsub.s32 %v225, %v242
        %v246 = vsub.s32 %v226, %v242
        %v247 = vsub.s32 %v227, %v242
        %v248 = vsub.s32 %v228, %v242
        %v249 = vsub.s32 %v229, %v242
        %v250 = vsub.s32 %v230, %v242
        %v251 = vsub.s32 %v231, %v242
        %v252 = vsub.s32 %v232, %v242
        %v253 = vsub.s32 %v233, %v242
        %v254 = vsub.s32 %v234, %v242
        %v255 = vsub.s32 %v235, %v242
        %v256 = vsub.s32 %v236, %v242
        %v257 = vsub.s32 %v237, %v242
        %v258 = vsub.s32 %v238, %v242
        %v259 = vlaneseq
        %v260 = vand.u32 %v259, 127
        %v261 = vadd.s32 %v260, 128
        %v262 = vadd.s32 %v260, 256
        %v263 = vadd.s32 %v260, 384
        %264 = vset.pattern.permute.xlu0 0
        %265 = vperm.xlu0 %264, %v243
        %v266 = vpop.permute.xlu0 %265
        %267 = vset.pattern.permute.xlu0 0
        %268 = vperm.xlu0 %267, %v244
        %v269 = vpop.permute.xlu0 %268
        %270 = vset.pattern.permute.xlu0 0
        %271 = vperm.xlu0 %270, %v245
        %v272 = vpop.permute.xlu0 %271
        %273 = vset.pattern.permute.xlu0 0
        %274 = vperm.xlu0 %273, %v246
        %v275 = vpop.permute.xlu0 %274
        %276 = vset.pattern.permute.xlu0 0
        %277 = vperm.xlu0 %276, %v247
        %v278 = vpop.permute.xlu0 %277
        %279 = vset.pattern.permute.xlu0 0
        %280 = vperm.xlu0 %279, %v248
        %v281 = vpop.permute.xlu0 %280
        %282 = vset.pattern.permute.xlu0 0
        %283 = vperm.xlu0 %282, %v249
        %v284 = vpop.permute.xlu0 %283
        %285 = vset.pattern.permute.xlu0 0
        %286 = vperm.xlu0 %285, %v250
        %v287 = vpop.permute.xlu0 %286
        %288 = vset.pattern.permute.xlu0 0
        %289 = vperm.xlu0 %288, %v251
        %v290 = vpop.permute.xlu0 %289
        %291 = vset.pattern.permute.xlu0 0
        %292 = vperm.xlu0 %291, %v252
        %v293 = vpop.permute.xlu0 %292
        %294 = vset.pattern.permute.xlu0 0
        %295 = vperm.xlu0 %294, %v253
        %v296 = vpop.permute.xlu0 %295
        %297 = vset.pattern.permute.xlu0 0
        %298 = vperm.xlu0 %297, %v254
        %v299 = vpop.permute.xlu0 %298
        %300 = vset.pattern.permute.xlu0 0
        %301 = vperm.xlu0 %300, %v255
        %v302 = vpop.permute.xlu0 %301
        %303 = vset.pattern.permute.xlu0 0
        %304 = vperm.xlu0 %303, %v256
        %v305 = vpop.permute.xlu0 %304
        %306 = vset.pattern.permute.xlu0 0
        %307 = vperm.xlu0 %306, %v257
        %v308 = vpop.permute.xlu0 %307
        %309 = vset.pattern.permute.xlu0 0
        %310 = vperm.xlu0 %309, %v258
        %v311 = vpop.permute.xlu0 %310
        %vm312 = vcmp.eq.s32.totalorder %v260, %v266
        %vm313 = vcmp.eq.s32.totalorder %v261, %v266
        %vm314 = vcmp.eq.s32.totalorder %v262, %v266
        %vm315 = vcmp.eq.s32.totalorder %v263, %v266
        %vm316 = vcmp.eq.s32.totalorder %v260, %v269
        %vm317 = vcmp.eq.s32.totalorder %v261, %v269
        %vm318 = vcmp.eq.s32.totalorder %v262, %v269
        %vm319 = vcmp.eq.s32.totalorder %v263, %v269
        %vm320 = vcmp.eq.s32.totalorder %v260, %v272
        %vm321 = vcmp.eq.s32.totalorder %v261, %v272
        %vm322 = vcmp.eq.s32.totalorder %v262, %v272
        %vm323 = vcmp.eq.s32.totalorder %v263, %v272
        %vm324 = vcmp.eq.s32.totalorder %v260, %v275
        %vm325 = vcmp.eq.s32.totalorder %v261, %v275
        %vm326 = vcmp.eq.s32.totalorder %v262, %v275
        %vm327 = vcmp.eq.s32.totalorder %v263, %v275
        %vm328 = vcmp.eq.s32.totalorder %v260, %v278
        %vm329 = vcmp.eq.s32.totalorder %v261, %v278
        %vm330 = vcmp.eq.s32.totalorder %v262, %v278
        %vm331 = vcmp.eq.s32.totalorder %v263, %v278
        %vm332 = vcmp.eq.s32.totalorder %v260, %v281
        %vm333 = vcmp.eq.s32.totalorder %v261, %v281
        %vm334 = vcmp.eq.s32.totalorder %v262, %v281
        %vm335 = vcmp.eq.s32.totalorder %v263, %v281
        %vm336 = vcmp.eq.s32.totalorder %v260, %v284
        %vm337 = vcmp.eq.s32.totalorder %v261, %v284
        %vm338 = vcmp.eq.s32.totalorder %v262, %v284
        %vm339 = vcmp.eq.s32.totalorder %v263, %v284
        %vm340 = vcmp.eq.s32.totalorder %v260, %v287
        %vm341 = vcmp.eq.s32.totalorder %v261, %v287
        %vm342 = vcmp.eq.s32.totalorder %v262, %v287
        %vm343 = vcmp.eq.s32.totalorder %v263, %v287
        %vm344 = vcmp.eq.s32.totalorder %v260, %v290
        %vm345 = vcmp.eq.s32.totalorder %v261, %v290
        %vm346 = vcmp.eq.s32.totalorder %v262, %v290
        %vm347 = vcmp.eq.s32.totalorder %v263, %v290
        %vm348 = vcmp.eq.s32.totalorder %v260, %v293
        %vm349 = vcmp.eq.s32.totalorder %v261, %v293
        %vm350 = vcmp.eq.s32.totalorder %v262, %v293
        %vm351 = vcmp.eq.s32.totalorder %v263, %v293
        %vm352 = vcmp.eq.s32.totalorder %v260, %v296
        %vm353 = vcmp.eq.s32.totalorder %v261, %v296
        %vm354 = vcmp.eq.s32.totalorder %v262, %v296
        %vm355 = vcmp.eq.s32.totalorder %v263, %v296
        %vm356 = vcmp.eq.s32.totalorder %v260, %v299
        %vm357 = vcmp.eq.s32.totalorder %v261, %v299
        %vm358 = vcmp.eq.s32.totalorder %v262, %v299
        %vm359 = vcmp.eq.s32.totalorder %v263, %v299
        %vm360 = vcmp.eq.s32.totalorder %v260, %v302
        %vm361 = vcmp.eq.s32.totalorder %v261, %v302
        %vm362 = vcmp.eq.s32.totalorder %v262, %v302
        %vm363 = vcmp.eq.s32.totalorder %v263, %v302
        %vm364 = vcmp.eq.s32.totalorder %v260, %v305
        %vm365 = vcmp.eq.s32.totalorder %v261, %v305
        %vm366 = vcmp.eq.s32.totalorder %v262, %v305
        %vm367 = vcmp.eq.s32.totalorder %v263, %v305
        %vm368 = vcmp.eq.s32.totalorder %v260, %v308
        %vm369 = vcmp.eq.s32.totalorder %v261, %v308
        %vm370 = vcmp.eq.s32.totalorder %v262, %v308
        %vm371 = vcmp.eq.s32.totalorder %v263, %v308
        %vm372 = vcmp.eq.s32.totalorder %v260, %v311
        %vm373 = vcmp.eq.s32.totalorder %v261, %v311
        %vm374 = vcmp.eq.s32.totalorder %v262, %v311
        %vm375 = vcmp.eq.s32.totalorder %v263, %v311
        %v376 = vsel %vm312, 1, 0
        %v377 = vsel %vm313, 1, 0
        %v378 = vsel %vm314, 1, 0
        %v379 = vsel %vm315, 1, 0
        %v380 = vsel %vm316, 1, 0
        %v381 = vsel %vm317, 1, 0
        %v382 = vsel %vm318, 1, 0
        %v383 = vsel %vm319, 1, 0
        %v384 = vsel %vm320, 1, 0
        %v385 = vsel %vm321, 1, 0
        %v386 = vsel %vm322, 1, 0
        %v387 = vsel %vm323, 1, 0
        %v388 = vsel %vm324, 1, 0
        %v389 = vsel %vm325, 1, 0
        %v390 = vsel %vm326, 1, 0
        %v391 = vsel %vm327, 1, 0
        %v392 = vsel %vm328, 1, 0
        %v393 = vsel %vm329, 1, 0
        %v394 = vsel %vm330, 1, 0
        %v395 = vsel %vm331, 1, 0
        %v396 = vsel %vm332, 1, 0
        %v397 = vsel %vm333, 1, 0
        %v398 = vsel %vm334, 1, 0
        %v399 = vsel %vm335, 1, 0
        %v400 = vsel %vm336, 1, 0
        %v401 = vsel %vm337, 1, 0
        %v402 = vsel %vm338, 1, 0
        %v403 = vsel %vm339, 1, 0
        %v404 = vsel %vm340, 1, 0
        %v405 = vsel %vm341, 1, 0
        %v406 = vsel %vm342, 1, 0
        %v407 = vsel %vm343, 1, 0
        %v408 = vsel %vm344, 1, 0
        %v409 = vsel %vm345, 1, 0
        %v410 = vsel %vm346, 1, 0
        %v411 = vsel %vm347, 1, 0
        %v412 = vsel %vm348, 1, 0
        %v413 = vsel %vm349, 1, 0
        %v414 = vsel %vm350, 1, 0
        %v415 = vsel %vm351, 1, 0
        %v416 = vsel %vm352, 1, 0
        %v417 = vsel %vm353, 1, 0
        %v418 = vsel %vm354, 1, 0
        %v419 = vsel %vm355, 1, 0
        %v420 = vsel %vm356, 1, 0
        %v421 = vsel %vm357, 1, 0
        %v422 = vsel %vm358, 1, 0
        %v423 = vsel %vm359, 1, 0
        %v424 = vsel %vm360, 1, 0
        %v425 = vsel %vm361, 1, 0
        %v426 = vsel %vm362, 1, 0
        %v427 = vsel %vm363, 1, 0
        %v428 = vsel %vm364, 1, 0
        %v429 = vsel %vm365, 1, 0
        %v430 = vsel %vm366, 1, 0
        %v431 = vsel %vm367, 1, 0
        %v432 = vsel %vm368, 1, 0
        %v433 = vsel %vm369, 1, 0
        %v434 = vsel %vm370, 1, 0
        %v435 = vsel %vm371, 1, 0
        %v436 = vsel %vm372, 1, 0
        %v437 = vsel %vm373, 1, 0
        %v438 = vsel %vm374, 1, 0
        %v439 = vsel %vm375, 1, 0
        %v440 = vcvt.s32.f32 %v376
        %v441 = vcvt.s32.f32 %v377
        %v442 = vcvt.s32.f32 %v378
        %v443 = vcvt.s32.f32 %v379
        %v444 = vcvt.s32.f32 %v380
        %v445 = vcvt.s32.f32 %v381
        %v446 = vcvt.s32.f32 %v382
        %v447 = vcvt.s32.f32 %v383
        %v448 = vcvt.s32.f32 %v384
        %v449 = vcvt.s32.f32 %v385
        %v450 = vcvt.s32.f32 %v386
        %v451 = vcvt.s32.f32 %v387
        %v452 = vcvt.s32.f32 %v388
        %v453 = vcvt.s32.f32 %v389
        %v454 = vcvt.s32.f32 %v390
        %v455 = vcvt.s32.f32 %v391
        %v456 = vcvt.s32.f32 %v392
        %v457 = vcvt.s32.f32 %v393
        %v458 = vcvt.s32.f32 %v394
        %v459 = vcvt.s32.f32 %v395
        %v460 = vcvt.s32.f32 %v396
        %v461 = vcvt.s32.f32 %v397
        %v462 = vcvt.s32.f32 %v398
        %v463 = vcvt.s32.f32 %v399
        %v464 = vcvt.s32.f32 %v400
        %v465 = vcvt.s32.f32 %v401
        %v466 = vcvt.s32.f32 %v402
        %v467 = vcvt.s32.f32 %v403
        %v468 = vcvt.s32.f32 %v404
        %v469 = vcvt.s32.f32 %v405
        %v470 = vcvt.s32.f32 %v406
        %v471 = vcvt.s32.f32 %v407
        %v472 = vcvt.s32.f32 %v408
        %v473 = vcvt.s32.f32 %v409
        %v474 = vcvt.s32.f32 %v410
        %v475 = vcvt.s32.f32 %v411
        %v476 = vcvt.s32.f32 %v412
        %v477 = vcvt.s32.f32 %v413
        %v478 = vcvt.s32.f32 %v414
        %v479 = vcvt.s32.f32 %v415
        %v480 = vcvt.s32.f32 %v416
        %v481 = vcvt.s32.f32 %v417
        %v482 = vcvt.s32.f32 %v418
        %v483 = vcvt.s32.f32 %v419
        %v484 = vcvt.s32.f32 %v420
        %v485 = vcvt.s32.f32 %v421
        %v486 = vcvt.s32.f32 %v422
        %v487 = vcvt.s32.f32 %v423
        %v488 = vcvt.s32.f32 %v424
        %v489 = vcvt.s32.f32 %v425
        %v490 = vcvt.s32.f32 %v426
        %v491 = vcvt.s32.f32 %v427
        %v492 = vcvt.s32.f32 %v428
        %v493 = vcvt.s32.f32 %v429
        %v494 = vcvt.s32.f32 %v430
        %v495 = vcvt.s32.f32 %v431
        %v496 = vcvt.s32.f32 %v432
        %v497 = vcvt.s32.f32 %v433
        %v498 = vcvt.s32.f32 %v434
        %v499 = vcvt.s32.f32 %v435
        %v500 = vcvt.s32.f32 %v436
        %v501 = vcvt.s32.f32 %v437
        %v502 = vcvt.s32.f32 %v438
        %v503 = vcvt.s32.f32 %v439
        %v504 = vpack.c.bf16 %v444, %v440
        %v505 = vpack.c.bf16 %v445, %v441
        %v506 = vpack.c.bf16 %v446, %v442
        %v507 = vpack.c.bf16 %v447, %v443
        %v508 = vpack.c.bf16 %v452, %v448
        %v509 = vpack.c.bf16 %v453, %v449
        %v510 = vpack.c.bf16 %v454, %v450
        %v511 = vpack.c.bf16 %v455, %v451
        %v512 = vpack.c.bf16 %v460, %v456
        %v513 = vpack.c.bf16 %v461, %v457
        %v514 = vpack.c.bf16 %v462, %v458
        %v515 = vpack.c.bf16 %v463, %v459
        %v516 = vpack.c.bf16 %v468, %v464
        %v517 = vpack.c.bf16 %v469, %v465
        %v518 = vpack.c.bf16 %v470, %v466
        %v519 = vpack.c.bf16 %v471, %v467
        %v520 = vpack.c.bf16 %v476, %v472
        %v521 = vpack.c.bf16 %v477, %v473
        %v522 = vpack.c.bf16 %v478, %v474
        %v523 = vpack.c.bf16 %v479, %v475
        %v524 = vpack.c.bf16 %v484, %v480
        %v525 = vpack.c.bf16 %v485, %v481
        %v526 = vpack.c.bf16 %v486, %v482
        %v527 = vpack.c.bf16 %v487, %v483
        %v528 = vpack.c.bf16 %v492, %v488
        %v529 = vpack.c.bf16 %v493, %v489
        %v530 = vpack.c.bf16 %v494, %v490
        %v531 = vpack.c.bf16 %v495, %v491
        %v532 = vpack.c.bf16 %v500, %v496
        %v533 = vpack.c.bf16 %v501, %v497
        %v534 = vpack.c.bf16 %v502, %v498
        %v535 = vpack.c.bf16 %v503, %v499
        %v536 = vld [vmem:[#allocation2] sm:$0xff]
        %v537 = vld [vmem:[#allocation2 + $0x8] sm:$0xff]
        %v538 = vld [vmem:[#allocation2 + $0x10] sm:$0xff]
        %v539 = vld [vmem:[#allocation2 + $0x18] sm:$0xff]
        %v540 = vld [vmem:[#allocation2 + $0x20] sm:$0xff]
        %v541 = vld [vmem:[#allocation2 + $0x28] sm:$0xff]
        %v542 = vld [vmem:[#allocation2 + $0x30] sm:$0xff]
        %v543 = vld [vmem:[#allocation2 + $0x38] sm:$0xff]
        %v546 = vunpack.c.l.b16 %v239
        %v547 = vunpack.c.l.b16 %v240
        %v548 = vpack.c.b16 %v547, %v546
        %550 = vmatpush.bf16.msra.mxu0 %v532
        %551 = vmatpush.bf16.msra.mxu0 %v528
        %552 = vmatpush.bf16.msra.mxu0 %v524
        %553 = vmatpush.bf16.msra.mxu0 %v520
        %554 = vmatpush.bf16.msra.mxu0 %v516
        %555 = vmatpush.bf16.msra.mxu0 %v512
        %556 = vmatpush.bf16.msra.mxu0 %v508
        %557 = vmatpush.bf16.msra.mxu0 %v504
        %558 = vmatmul.bf16.gmra.mxu0 %v548
        %v559 = vpop.f32.mrf.mxu0
        %v560 = vadd.f32 0.0, %v559
        %v561 = vpop.f32.mrf.mxu0
        %v562 = vadd.f32 0.0, %v561
        %563 = vdwg.mxu0
        %564 = vmatpush.bf16.msra.mxu0 %v533
        %565 = vmatpush.bf16.msra.mxu0 %v529
        %566 = vmatpush.bf16.msra.mxu0 %v525
        %567 = vmatpush.bf16.msra.mxu0 %v521
        %568 = vmatpush.bf16.msra.mxu0 %v517
        %569 = vmatpush.bf16.msra.mxu0 %v513
        %570 = vmatpush.bf16.msra.mxu0 %v509
        %571 = vmatpush.bf16.msra.mxu0 %v505
        %572 = vmatmul.bf16.gmra.mxu0 %v548
        %v573 = vpop.f32.mrf.mxu0
        %v574 = vadd.f32 0.0, %v573
        %v575 = vpop.f32.mrf.mxu0
        %v576 = vadd.f32 0.0, %v575
        %577 = vdwg.mxu0
        %578 = vmatpush.bf16.msra.mxu0 %v534
        %579 = vmatpush.bf16.msra.mxu0 %v530
        %580 = vmatpush.bf16.msra.mxu0 %v526
        %581 = vmatpush.bf16.msra.mxu0 %v522
        %582 = vmatpush.bf16.msra.mxu0 %v518
        %583 = vmatpush.bf16.msra.mxu0 %v514
        %584 = vmatpush.bf16.msra.mxu0 %v510
        %585 = vmatpush.bf16.msra.mxu0 %v506
        %586 = vmatmul.bf16.gmra.mxu0 %v548
        %v587 = vpop.f32.mrf.mxu0
        %v588 = vadd.f32 0.0, %v587
        %v589 = vpop.f32.mrf.mxu0
        %v590 = vadd.f32 0.0, %v589
        %591 = vdwg.mxu0
        %592 = vmatpush.bf16.msra.mxu0 %v535
        %593 = vmatpush.bf16.msra.mxu0 %v531
        %594 = vmatpush.bf16.msra.mxu0 %v527
        %595 = vmatpush.bf16.msra.mxu0 %v523
        %596 = vmatpush.bf16.msra.mxu0 %v519
        %597 = vmatpush.bf16.msra.mxu0 %v515
        %598 = vmatpush.bf16.msra.mxu0 %v511
        %599 = vmatpush.bf16.msra.mxu0 %v507
        %600 = vmatmul.bf16.gmra.mxu0 %v548
        %v601 = vpop.f32.mrf.mxu0
        %v602 = vadd.f32 0.0, %v601
        %v603 = vpop.f32.mrf.mxu0
        %v604 = vadd.f32 0.0, %v603
        %605 = vdwg.mxu0
        %v606 = vadd.f32 %v536, %v560
        %v607 = vadd.f32 %v537, %v574
        %v608 = vadd.f32 %v538, %v588
        %v609 = vadd.f32 %v539, %v602
        %v610 = vadd.f32 %v540, %v562
        %v611 = vadd.f32 %v541, %v576
        %v612 = vadd.f32 %v542, %v590
        %v613 = vadd.f32 %v543, %v604
        %614 = vst [vmem:[#allocation2] sm:$0xff] %v606
        %615 = vst [vmem:[#allocation2 + $0x8] sm:$0xff] %v607
        %616 = vst [vmem:[#allocation2 + $0x10] sm:$0xff] %v608
        %617 = vst [vmem:[#allocation2 + $0x18] sm:$0xff] %v609
        %618 = vst [vmem:[#allocation2 + $0x20] sm:$0xff] %v610
        %619 = vst [vmem:[#allocation2 + $0x28] sm:$0xff] %v611
        %620 = vst [vmem:[#allocation2 + $0x30] sm:$0xff] %v612
        %621 = vst [vmem:[#allocation2 + $0x38] sm:$0xff] %v613
        // Predicated region
        $region33: #{tpu_custom_call.1} parent=27 // pred_check
          %p622 = pneg %p211
        $region34: #{tpu_custom_call.1} parent=27 // pred_check_branch
          %624 = sbr.rel (%p622) target = $region36
        $region35: #{tpu_custom_call.1} parent=27 // pred_region
          %v625 = vld [vmem:[#allocation2] sm:$0xff]
          %v626 = vld [vmem:[#allocation2 + $0x8] sm:$0xff]
          %v627 = vld [vmem:[#allocation2 + $0x10] sm:$0xff]
          %v628 = vld [vmem:[#allocation2 + $0x18] sm:$0xff]
          %v629 = vld [vmem:[#allocation2 + $0x20] sm:$0xff]
          %v630 = vld [vmem:[#allocation2 + $0x28] sm:$0xff]
          %v631 = vld [vmem:[#allocation2 + $0x30] sm:$0xff]
          %v632 = vld [vmem:[#allocation2 + $0x38] sm:$0xff]
          %v633 = vmax.f32 %v625, 1.0
          %v634 = vmax.f32 %v626, 1.0
          %v635 = vmax.f32 %v627, 1.0
          %v636 = vmax.f32 %v628, 1.0
          %v637 = vrcp.pop %v633
          %v638 = vmul.f32 %v633, %v637
          %v639 = vsub.f32 1.0, %v638
          %v640 = vmul.f32 %v637, %v639
          %v641 = vadd.f32 %v637, %v640
          %vm642 = vweird.f32 %v633
          %vm643 = vweird.f32 %v637
          %vm644 = vmor %vm642, %vm643
          %v645 = vsel %vm644, %v637, %v641
          %v646 = vand.u32 2147483647, %v633
          %vm647 = vcmp.eq.f32.partialorder %v646, 8.507059e+37
          %v648 = vand.u32 %v633, 2147483648
          %v649 = vor.u32 1.1754944e-38, %v648
          %v650 = vsel %vm647, %v649, %v645
          %v651 = vrcp.pop %v634
          %v652 = vmul.f32 %v634, %v651
          %v653 = vsub.f32 1.0, %v652
          %v654 = vmul.f32 %v651, %v653
          %v655 = vadd.f32 %v651, %v654
          %vm656 = vweird.f32 %v634
          %vm657 = vweird.f32 %v651
          %vm658 = vmor %vm656, %vm657
          %v659 = vsel %vm658, %v651, %v655
          %v660 = vand.u32 2147483647, %v634
          %vm661 = vcmp.eq.f32.partialorder %v660, 8.507059e+37
          %v662 = vand.u32 %v634, 2147483648
          %v663 = vor.u32 1.1754944e-38, %v662
          %v664 = vsel %vm661, %v663, %v659
          %v665 = vrcp.pop %v635
          %v666 = vmul.f32 %v635, %v665
          %v667 = vsub.f32 1.0, %v666
          %v668 = vmul.f32 %v665, %v667
          %v669 = vadd.f32 %v665, %v668
          %vm670 = vweird.f32 %v635
          %vm671 = vweird.f32 %v665
          %vm672 = vmor %vm670, %vm671
          %v673 = vsel %vm672, %v665, %v669
          %v674 = vand.u32 2147483647, %v635
          %vm675 = vcmp.eq.f32.partialorder %v674, 8.507059e+37
          %v676 = vand.u32 %v635, 2147483648
          %v677 = vor.u32 1.1754944e-38, %v676
          %v678 = vsel %vm675, %v677, %v673
          %v679 = vrcp.pop %v636
          %v680 = vmul.f32 %v636, %v679
          %v681 = vsub.f32 1.0, %v680
          %v682 = vmul.f32 %v679, %v681
          %v683 = vadd.f32 %v679, %v682
          %vm684 = vweird.f32 %v636
          %vm685 = vweird.f32 %v679
          %vm686 = vmor %vm684, %vm685
          %v687 = vsel %vm686, %v679, %v683
          %v688 = vand.u32 2147483647, %v636
          %vm689 = vcmp.eq.f32.partialorder %v688, 8.507059e+37
          %v690 = vand.u32 %v636, 2147483648
          %v691 = vor.u32 1.1754944e-38, %v690
          %v692 = vsel %vm689, %v691, %v687
          %v693 = vperm.slane %v650, 6
          %v694 = vperm.slane %v664, 6
          %v695 = vperm.slane %v678, 6
          %v696 = vperm.slane %v692, 6
          %v697 = vmul.f32 %v625, %v693
          %v698 = vmul.f32 %v626, %v694
          %v699 = vmul.f32 %v627, %v695
          %v700 = vmul.f32 %v628, %v696
          %v701 = vmul.f32 %v629, %v693
          %v702 = vmul.f32 %v630, %v694
          %v703 = vmul.f32 %v631, %v695
          %v704 = vmul.f32 %v632, %v696
          %705 = vst [vmem:[%s191] sm:$0xff] %v697
          %706 = vst [vmem:[%s191 + $0x8] sm:$0xff] %v698
          %707 = vst [vmem:[%s191 + $0x10] sm:$0xff] %v699
          %708 = vst [vmem:[%s191 + $0x18] sm:$0xff] %v700
          %709 = vst [vmem:[%s191 + $0x20] sm:$0xff] %v701
          %710 = vst [vmem:[%s191 + $0x28] sm:$0xff] %v702
          %711 = vst [vmem:[%s191 + $0x30] sm:$0xff] %v703
          %712 = vst [vmem:[%s191 + $0x38] sm:$0xff] %v704
        $region36: #{tpu_custom_call.1} parent=27 // pred_fallthru
          _
        %s713 = sand.u32 %s101, 1
        %s714 = scalar_lea.sflag [#allocation4], %s713
        %s715 = sand.u32 %s101, 1
        %s716 = smul.addr %s715, 64
        %s717 = scalar_lea.vmem [#allocation3], %s716
        // Predicated region
        $region37: #{tpu_custom_call.1} parent=27 // pred_check
          %p718 = pneg %p111
        $region38: #{tpu_custom_call.1} parent=27 // pred_check_branch
          %720 = sbr.rel (%p718) target = $region40
        $region39: #{tpu_custom_call.1} parent=27 // pred_region
          %s721 = smul.u32 4, %s22
          %723 = vsyncadd %s714, 0
          %s724 = smul.addr %s21, 16
          %s725 = sadd.s32 %s721, %s724
          %s726 = smul.addr %s725, 8
          %s727 = scalar_lea.hbm %s2, %s726
          %s728 = sshll.u32 %s717, 4
          %s729 = int_to_ptr.vmem [resolvable:$true] %s728
          %s730 = sshll.u32 %s727, 4
          %s731 = int_to_ptr.hbm [resolvable:$true] %s730
          %736 = dma.vmem_to_hbm [thread:$0]  %s729, 1024, %s731, %s714, 512, 1024, 32
        $region40: #{tpu_custom_call.1} parent=27 // pred_fallthru
          _
      $region28: #{tpu_custom_call.1} parent=5 // pred_fallthru
        _
      %p737 = scmp.le.s32.totalorder 2, %s11
      // Predicated region
      $region41: #{tpu_custom_call.1} parent=5 // pred_check
        %p738 = pneg %p737
      $region42: #{tpu_custom_call.1} parent=5 // pred_check_branch
        %740 = sbr.rel (%p738) target = $region44
      $region43: #{tpu_custom_call.1} parent=5 // pred_region
        %s741 = ssub.s32 %s11, 2
        // Predicated region
        $region45: #{tpu_custom_call.1} parent=43 // pred_check
          %p742 = pneg %p117
        $region46: #{tpu_custom_call.1} parent=43 // pred_check_branch
          %744 = sbr.rel (%p742) target = $region48
        $region47: #{tpu_custom_call.1} parent=43 // pred_region
          %s745 = sand.u32 %s102, 1
          %s746 = scalar_lea.sflag [#allocation4], %s745
          %s747 = sand.u32 %s102, 1
          %s748 = smul.addr %s747, 64
          %s749 = scalar_lea.vmem [#allocation3], %s748
          %751 = dma.done %s746, 1024
        $region48: #{tpu_custom_call.1} parent=43 // pred_fallthru
          _
      $region44: #{tpu_custom_call.1} parent=5 // pred_fallthru
        _
    $region6: #{tpu_custom_call.1} parent=1 // loop_footer
      %s15 = sadd.s32 1, %s11
    $region7: #{tpu_custom_call.1} parent=1 // loop_footer_branch
      %10 = sbr.rel target = $region3
    $region8: #{tpu_custom_call.1} parent=1 // loop_exit
      _
    %752 = vsyncpa [#allocation4], 1
    %s753 = scalar_lea.sflag [#allocation4], 1
    %754 = vsyncpa %s753, 1

</llo_original>
